<compile_context>
chip_gen: v7x
topology: tpu7x:2x2x1
jax: 0.10.0
libtpu: 0.0.40
codegen_flags: <defaults>
</compile_context>

<pallas_src>
import math
import functools

import jax
import jax.numpy as jnp
from jax import lax
from jax.experimental import pallas as pl
from jax.experimental.pallas import tpu as pltpu


def _layernorm(v, g, b, eps=1e-5):
    v = v.astype(jnp.float32)
    mu = jnp.mean(v, axis=-1, keepdims=True)
    var = jnp.mean((v - mu) ** 2, axis=-1, keepdims=True)
    return (v - mu) * lax.rsqrt(var + eps) * g + b


def _gelu_tanh(h):
    c0 = math.sqrt(2.0 / math.pi)
    return 0.5 * h * (1.0 + jnp.tanh(c0 * (h + 0.044715 * h * h * h)))


# ---------------------------------------------------------------------------
# Pass 1: ln_1 + qkv projection (q pre-scaled by 1/sqrt(head_dim)), bf16 out.
# ---------------------------------------------------------------------------
def qkv_kernel(x_ref, g_ref, b_ref, w_ref, bias_ref, q_ref, k_ref, v_ref, *, n_head):
    x = x_ref[0]                                   # (TQ, C) f32
    C = x.shape[-1]
    hd = C // n_head

    ln = _layernorm(x, g_ref[...], b_ref[...]).astype(jnp.bfloat16)
    qkv = jnp.dot(ln, w_ref[...], preferred_element_type=jnp.float32) + bias_ref[...]

    scale = 1.0 / math.sqrt(hd)
    q_ref[0] = (qkv[:, 0 * C:1 * C] * scale).astype(jnp.bfloat16)
    k_ref[0] = qkv[:, 1 * C:2 * C].astype(jnp.bfloat16)
    v_ref[0] = qkv[:, 2 * C:3 * C].astype(jnp.bfloat16)


# ---------------------------------------------------------------------------
# Pass 2: causal attention (per-head, q-tiled, KV-chunked online softmax with
#         causal skip) + c_proj + residual, then ln_2 + MLP(GELU tanh) + residual.
# ---------------------------------------------------------------------------
def attn_mlp_kernel(x_ref, q_ref, k_ref, v_ref,
                    w_ap_ref, b_ap_ref,
                    ln2_g_ref, ln2_b_ref,
                    w_fc_ref, b_fc_ref,
                    w_mp_ref, b_mp_ref,
                    o_ref, y_sc, *, n_head, eup_dtype):
    x = x_ref[0]                                   # (TQ, C) f32 residual stream
    TQ, C = x.shape
    hd = C // n_head
    tk = TQ                                        # KV chunk size == q tile size
    i_q = pl.program_id(1)                         # index of the diagonal KV chunk

    # Causal mask inside the diagonal chunk (q-tile and kv-chunk are aligned, so
    # the mask is tile-local and identical for every q-tile). Finite -1e30 bias.
    row = lax.broadcasted_iota(jnp.int32, (TQ, tk), 0)
    col = lax.broadcasted_iota(jnp.int32, (TQ, tk), 1)
    mask_bias = jnp.where(col <= row, 0.0, -1e30).astype(jnp.float32)

    diag_off = pl.multiple_of(i_q * tk, tk)

    cdims = (((1,), (1,)), ((), ()))               # q (TQ,hd) x k (tk,hd) -> (TQ,tk)

    for h in range(n_head):
        sl = slice(h * hd, (h + 1) * hd)
        q_h = q_ref[0, :, sl]                      # (TQ, hd) bf16, pre-scaled

        # --- diagonal (partially masked) chunk: initializes the softmax state ---
        k_d = k_ref[0, pl.ds(diag_off, tk), sl]    # (tk, hd) bf16
        v_d = v_ref[0, pl.ds(diag_off, tk), sl]    # (tk, hd) bf16
        sc = lax.dot_general(q_h, k_d, cdims, preferred_element_type=jnp.float32)
        sc = sc + mask_bias
        m = jnp.max(sc, axis=-1, keepdims=True)                       # f32 stats
        p = jnp.exp((sc - m).astype(eup_dtype))                       # bf16 EUP on v6e/v7x
        l = jnp.sum(p.astype(jnp.float32), axis=-1, keepdims=True)    # f32 sum
        acc = jnp.dot(p.astype(jnp.bfloat16), v_d, preferred_element_type=jnp.float32)

        # --- fully-unmasked chunks strictly below the diagonal (causal skip) ---
        def body(j, carry):
            m_c, l_c, acc_c = carry
            off = pl.multiple_of(j * tk, tk)
            k_j = k_ref[0, pl.ds(off, tk), sl]
            v_j = v_ref[0, pl.ds(off, tk), sl]
            s = lax.dot_general(q_h, k_j, cdims, preferred_element_type=jnp.float32)
            m_new = jnp.maximum(m_c, jnp.max(s, axis=-1, keepdims=True))
            alpha = jnp.exp(m_c - m_new)                               # (TQ,1) f32
            pj = jnp.exp((s - m_new).astype(eup_dtype))
            l_new = alpha * l_c + jnp.sum(pj.astype(jnp.float32), axis=-1, keepdims=True)
            acc_new = alpha * acc_c + jnp.dot(pj.astype(jnp.bfloat16), v_j,
                                              preferred_element_type=jnp.float32)
            return m_new, l_new, acc_new

        m, l, acc = lax.fori_loop(0, i_q, body, (m, l, acc))

        # Normalize AFTER the matmul (VPU work on (TQ,hd), not (TQ,T)).
        y_h = acc * pl.reciprocal(l, approx=True)
        y_sc[:, sl] = y_h.astype(jnp.bfloat16)     # per-head slice of (TQ, C) scratch

    attn_out = jnp.dot(y_sc[...], w_ap_ref[...],
                       preferred_element_type=jnp.float32) + b_ap_ref[...]
    x1 = x + attn_out                              # residual 1 (f32)

    ln2 = _layernorm(x1, ln2_g_ref[...], ln2_b_ref[...]).astype(jnp.bfloat16)
    h1 = jnp.dot(ln2, w_fc_ref[...], preferred_element_type=jnp.float32) + b_fc_ref[...]
    act = _gelu_tanh(h1.astype(eup_dtype)).astype(jnp.bfloat16)   # bf16 tanh on v6e/v7x
    m1 = jnp.dot(act, w_mp_ref[...], preferred_element_type=jnp.float32) + b_mp_ref[...]
    o_ref[0] = x1 + m1                             # residual 2 (f32)


# ---------------------------------------------------------------------------
# Wrapper (generation-aware tiling / VMEM / EUP-dtype choices)
# ---------------------------------------------------------------------------
def _device_kind():
    try:
        return jax.devices()[0].device_kind.lower()
    except Exception:
        return ""


def gpt2_block(x, params, n_head, tq=None):
    B, T, C = x.shape
    (ln1_g, ln1_b, w_qkv, b_qkv, w_ap, b_ap,
     ln2_g, ln2_b, w_fc, b_fc, w_mp, b_mp) = params

    kind = _device_kind()
    # bf16 EUP/VPU exists on v6e/v7x; keep elementwise math f32 on v5e/v4/unknown.
    eup_dtype = jnp.bfloat16 if (("v6" in kind) or ("v7" in kind)) else jnp.float32

    if tq is None:
        pref = 128 if "v7" in kind else 256        # v7x: 64 MiB VMEM -> smaller q tile
        tq = next((c for c in (pref, 256, 128, 64, 32, 16, 8)
                   if c <= T and T % c == 0), T)
    assert T % tq == 0, "tq must divide T (no remainder-tile handling)"
    nq = T // tq
    bf = jnp.bfloat16

    if "v7" in kind:                               # 64 MiB physical: leave headroom
        vmem_limit = 56 * 1024 * 1024
    elif ("v6" in kind) or ("v5" in kind):         # 128 MiB physical
        vmem_limit = 100 * 1024 * 1024
    else:
        vmem_limit = 64 * 1024 * 1024

    # bf16 weights for MXU matmuls (f32 accumulation inside the kernels).
    w_qkv_b = w_qkv.astype(bf)
    w_ap_b = w_ap.astype(bf)
    w_fc_b = w_fc.astype(bf)
    w_mp_b = w_mp.astype(bf)

    def const(shp):
        return pl.BlockSpec(shp, lambda b, i: (0,) * len(shp))

    cparams = pltpu.CompilerParams(
        dimension_semantics=("parallel", "parallel"),
        vmem_limit_bytes=vmem_limit)

    # ---- pass 1: ln_1 + qkv projection ----
    q, k, v = pl.pallas_call(
        functools.partial(qkv_kernel, n_head=n_head),
        out_shape=[jax.ShapeDtypeStruct((B, T, C), bf)] * 3,
        grid_spec=pltpu.PrefetchScalarGridSpec(
            num_scalar_prefetch=0,
            grid=(B, nq),
            in_specs=[
                pl.BlockSpec((1, tq, C), lambda b, i: (b, i, 0)),   # x tile
                const((1, C)), const((1, C)),                       # ln_1 gamma/beta
                const((C, 3 * C)), const((1, 3 * C)),               # c_attn W, b
            ],
            out_specs=[pl.BlockSpec((1, tq, C), lambda b, i: (b, i, 0))] * 3,
        ),
        compiler_params=cparams,
    )(x, ln1_g, ln1_b, w_qkv_b, b_qkv)

    # ---- pass 2: attention + c_proj + residual + ln_2 + MLP + residual ----
    out = pl.pallas_call(
        functools.partial(attn_mlp_kernel, n_head=n_head, eup_dtype=eup_dtype),
        out_shape=jax.ShapeDtypeStruct((B, T, C), jnp.float32),
        grid_spec=pltpu.PrefetchScalarGridSpec(
            num_scalar_prefetch=0,
            grid=(B, nq),
            in_specs=[
                pl.BlockSpec((1, tq, C), lambda b, i: (b, i, 0)),   # x tile (residual)
                pl.BlockSpec((1, tq, C), lambda b, i: (b, i, 0)),   # q tile
                pl.BlockSpec((1, T, C), lambda b, i: (b, 0, 0)),    # k (full seq, per batch)
                pl.BlockSpec((1, T, C), lambda b, i: (b, 0, 0)),    # v (full seq, per batch)
                const((C, C)), const((1, C)),                       # attn c_proj W, b
                const((1, C)), const((1, C)),                       # ln_2 gamma/beta
                const((C, 4 * C)), const((1, 4 * C)),               # c_fc W, b
                const((4 * C, C)), const((1, C)),                   # mlp c_proj W, b
            ],
            out_specs=pl.BlockSpec((1, tq, C), lambda b, i: (b, i, 0)),
            scratch_shapes=[pltpu.VMEM((tq, C), bf)],               # per-head y accumulator
        ),
        compiler_params=cparams,
    )(x, q, k, v, w_ap_b, b_ap, ln2_g, ln2_b, w_fc_b, b_fc, w_mp_b, b_mp)
    return out


# ---------------------------------------------------------------------------
# Pure-JAX f32 reference for validation
# ---------------------------------------------------------------------------
def gpt2_block_ref(x, params, n_head):
    (ln1_g, ln1_b, w_qkv, b_qkv, w_ap, b_ap,
     ln2_g, ln2_b, w_fc, b_fc, w_mp, b_mp) = params
    B, T, C = x.shape
    hd = C // n_head

    ln1 = _layernorm(x, ln1_g, ln1_b)
    qkv = ln1 @ w_qkv + b_qkv
    q, k, v = jnp.split(qkv, 3, axis=-1)
    q = q.reshape(B, T, n_head, hd).transpose(0, 2, 1, 3)
    k = k.reshape(B, T, n_head, hd).transpose(0, 2, 1, 3)
    v = v.reshape(B, T, n_head, hd).transpose(0, 2, 1, 3)
    scores = jnp.einsum('bhqd,bhkd->bhqk', q, k) / math.sqrt(hd)
    mask = jnp.tril(jnp.ones((T, T), dtype=bool))
    scores = jnp.where(mask, scores, -jnp.inf)
    p = jax.nn.softmax(scores, axis=-1)
    y = jnp.einsum('bhqk,bhkd->bhqd', p, v)
    y = y.transpose(0, 2, 1, 3).reshape(B, T, C)
    y = y @ w_ap + b_ap
    x = x + y
    ln2 = _layernorm(x, ln2_g, ln2_b)
    h = _gelu_tanh(ln2 @ w_fc + b_fc)
    return x + (h @ w_mp + b_mp)


def _make_params(key, C):
    ks = jax.random.split(key, 8)
    std = 0.02
    return (
        jnp.ones((1, C), jnp.float32),                                    # ln_1 gamma
        jnp.zeros((1, C), jnp.float32),                                   # ln_1 beta
        std * jax.random.normal(ks[0], (C, 3 * C), jnp.float32),          # c_attn W
        std * jax.random.normal(ks[1], (1, 3 * C), jnp.float32),          # c_attn b
        std * jax.random.normal(ks[2], (C, C), jnp.float32),              # attn c_proj W
        std * jax.random.normal(ks[3], (1, C), jnp.float32),              # attn c_proj b
        jnp.ones((1, C), jnp.float32),                                    # ln_2 gamma
        jnp.zeros((1, C), jnp.float32),                                   # ln_2 beta
        std * jax.random.normal(ks[4], (C, 4 * C), jnp.float32),          # c_fc W
        std * jax.random.normal(ks[5], (1, 4 * C), jnp.float32),          # c_fc b
        std * jax.random.normal(ks[6], (4 * C, C), jnp.float32),          # mlp c_proj W
        std * jax.random.normal(ks[7], (1, C), jnp.float32),              # mlp c_proj b
    )


if __name__ == "__main__":
    key = jax.random.PRNGKey(0)
    k_par, k_x1, k_x2 = jax.random.split(key, 3)

    # Test 1: small shapes consistent with the module (batch=2, seq=8, n_embd=32,
    # heads=4). Single q-tile -> only the diagonal-chunk path runs.
    B, T, C, n_head = 2, 8, 32, 4
    params = _make_params(k_par, C)
    x = jax.random.normal(k_x1, (B, T, C), jnp.float32)
    out = jax.block_until_ready(gpt2_block(x, params, n_head))
    ref = gpt2_block_ref(x, params, n_head)
    assert out.shape == (B, T, C)
    assert jnp.allclose(out, ref, atol=2e-2, rtol=2e-2), "mismatch vs reference (single tile)"

    # Test 2: multiple q-tiles (tq=8, T=32) to exercise the chunked online-softmax
    # loop with nonzero dynamic trip counts (the causal-skip path).
    T2 = 32
    x2 = jax.random.normal(k_x2, (B, T2, C), jnp.float32)
    out2 = jax.block_until_ready(gpt2_block(x2, params, n_head, tq=8))
    ref2 = gpt2_block_ref(x2, params, n_head)
    assert out2.shape == (B, T2, C)
    assert jnp.allclose(out2, ref2, atol=2e-2, rtol=2e-2), "mismatch vs reference (chunked)"

    print("KERNEL_OK")
</pallas_src>

<mosaic_0001>
module attributes {stable_mosaic.version = 11 : i64} {
  func.func @qkv_kernel(%arg0: i32, %arg1: i32, %arg2: memref<1x8x32xf32, #tpu.memory_space<vmem>>, %arg3: memref<1x32xf32, #tpu.memory_space<vmem>>, %arg4: memref<1x32xf32, #tpu.memory_space<vmem>>, %arg5: memref<32x96xbf16, #tpu.memory_space<vmem>>, %arg6: memref<1x96xf32, #tpu.memory_space<vmem>>, %arg7: memref<1x8x32xbf16, #tpu.memory_space<vmem>>, %arg8: memref<1x8x32xbf16, #tpu.memory_space<vmem>>, %arg9: memref<1x8x32xbf16, #tpu.memory_space<vmem>>) attributes {dimension_semantics = [#tpu.dimension_semantics<parallel>, #tpu.dimension_semantics<parallel>], iteration_bounds = array<i64: 2, 1>, scalar_prefetch = 0 : i64, scratch_operands = 0 : i64, tpu.core_type = #tpu.core_type<tc>, window_params = [{transform_indices = @transform_0, window_bounds = array<i64: 1, 8, 32>}, {pipeline_mode = #tpu.pipeline_mode<synchronous>, transform_indices = @transform_1, window_bounds = array<i64: 1, 32>}, {pipeline_mode = #tpu.pipeline_mode<synchronous>, transform_indices = @transform_2, window_bounds = array<i64: 1, 32>}, {pipeline_mode = #tpu.pipeline_mode<synchronous>, transform_indices = @transform_3, window_bounds = array<i64: 32, 96>}, {pipeline_mode = #tpu.pipeline_mode<synchronous>, transform_indices = @transform_4, window_bounds = array<i64: 1, 96>}, {transform_indices = @transform_5, window_bounds = array<i64: 1, 8, 32>}, {transform_indices = @transform_6, window_bounds = array<i64: 1, 8, 32>}, {transform_indices = @transform_7, window_bounds = array<i64: 1, 8, 32>}]} {
    %c0 = arith.constant 0 : index
    %c0_0 = arith.constant 0 : index
    %c0_1 = arith.constant 0 : index
    %0 = vector.load %arg2[%c0, %c0_0, %c0_1] : memref<1x8x32xf32, #tpu.memory_space<vmem>>, vector<1x8x32xf32>
    %1 = vector.shape_cast %0 : vector<1x8x32xf32> to vector<8x32xf32>
    %c0_2 = arith.constant 0 : index
    %c0_3 = arith.constant 0 : index
    %2 = vector.load %arg3[%c0_2, %c0_3] : memref<1x32xf32, #tpu.memory_space<vmem>>, vector<1x32xf32>
    %c0_4 = arith.constant 0 : index
    %c0_5 = arith.constant 0 : index
    %3 = vector.load %arg4[%c0_4, %c0_5] : memref<1x32xf32, #tpu.memory_space<vmem>>, vector<1x32xf32>
    %cst = arith.constant dense<0.000000e+00> : vector<8xf32>
    %4 = vector.multi_reduction <add>, %1, %cst [1] : vector<8x32xf32> to vector<8xf32>
    %5 = vector.shape_cast %4 : vector<8xf32> to vector<8x1xf32>
    %cst_6 = arith.constant 3.200000e+01 : f32
    %6 = vector.broadcast %cst_6 : f32 to vector<8x1xf32>
    %7 = arith.divf %5, %6 : vector<8x1xf32>
    %8 = vector.broadcast %7 : vector<8x1xf32> to vector<8x32xf32>
    %9 = arith.subf %1, %8 : vector<8x32xf32>
    %10 = arith.mulf %9, %9 : vector<8x32xf32>
    %cst_7 = arith.constant dense<0.000000e+00> : vector<8xf32>
    %11 = vector.multi_reduction <add>, %10, %cst_7 [1] : vector<8x32xf32> to vector<8xf32>
    %12 = vector.shape_cast %11 : vector<8xf32> to vector<8x1xf32>
    %cst_8 = arith.constant 3.200000e+01 : f32
    %13 = vector.broadcast %cst_8 : f32 to vector<8x1xf32>
    %14 = arith.divf %12, %13 : vector<8x1xf32>
    %15 = vector.broadcast %7 : vector<8x1xf32> to vector<8x32xf32>
    %16 = arith.subf %1, %15 : vector<8x32xf32>
    %cst_9 = arith.constant 9.99999974E-6 : f32
    %17 = vector.broadcast %cst_9 : f32 to vector<8x1xf32>
    %18 = arith.addf %14, %17 : vector<8x1xf32>
    %19 = math.rsqrt %18 : vector<8x1xf32>
    %20 = vector.broadcast %19 : vector<8x1xf32> to vector<8x32xf32>
    %21 = arith.mulf %16, %20 : vector<8x32xf32>
    %22 = vector.broadcast %2 : vector<1x32xf32> to vector<8x32xf32>
    %23 = arith.mulf %21, %22 : vector<8x32xf32>
    %24 = vector.broadcast %3 : vector<1x32xf32> to vector<8x32xf32>
    %25 = arith.addf %23, %24 : vector<8x32xf32>
    %26 = arith.truncf %25 : vector<8x32xf32> to vector<8x32xbf16>
    %c0_10 = arith.constant 0 : index
    %c0_11 = arith.constant 0 : index
    %27 = vector.load %arg5[%c0_10, %c0_11] : memref<32x96xbf16, #tpu.memory_space<vmem>>, vector<32x96xbf16>
    %cst_12 = arith.constant dense<0.000000e+00> : vector<8x96xf32>
    %28 = tpu.matmul %26, %27, %cst_12 {dimension_numbers = #tpu.dot_dimension_numbers<[1], [0], [0], [1], [0, 0, 1, 1], [], []>} : vector<8x32xbf16>, vector<32x96xbf16>, vector<8x96xf32> -> vector<8x96xf32>
    %c0_13 = arith.constant 0 : index
    %c0_14 = arith.constant 0 : index
    %29 = vector.load %arg6[%c0_13, %c0_14] : memref<1x96xf32, #tpu.memory_space<vmem>>, vector<1x96xf32>
    %30 = vector.broadcast %29 : vector<1x96xf32> to vector<8x96xf32>
    %31 = arith.addf %28, %30 : vector<8x96xf32>
    %32 = vector.extract_strided_slice %31 {offsets = [0, 0], sizes = [8, 32], strides = [1, 1]} : vector<8x96xf32> to vector<8x32xf32>
    %cst_15 = arith.constant 0.353553385 : f32
    %33 = vector.broadcast %cst_15 : f32 to vector<8x32xf32>
    %34 = arith.mulf %32, %33 : vector<8x32xf32>
    %35 = arith.truncf %34 : vector<8x32xf32> to vector<8x32xbf16>
    %c0_16 = arith.constant 0 : index
    %c0_17 = arith.constant 0 : index
    %c0_18 = arith.constant 0 : index
    %36 = vector.load %arg7[%c0_16, %c0_17, %c0_18] : memref<1x8x32xbf16, #tpu.memory_space<vmem>>, vector<1x8x32xbf16>
    %37 = vector.shape_cast %36 : vector<1x8x32xbf16> to vector<8x32xbf16>
    %38 = vector.shape_cast %35 : vector<8x32xbf16> to vector<1x8x32xbf16>
    tpu.vector_store %arg7[%c0_16, %c0_17, %c0_18], %38 {strides = array<i32>} : memref<1x8x32xbf16, #tpu.memory_space<vmem>>, vector<1x8x32xbf16>,
    %39 = vector.extract_strided_slice %31 {offsets = [0, 32], sizes = [8, 32], strides = [1, 1]} : vector<8x96xf32> to vector<8x32xf32>
    %40 = arith.truncf %39 : vector<8x32xf32> to vector<8x32xbf16>
    %c0_19 = arith.constant 0 : index
    %c0_20 = arith.constant 0 : index
    %c0_21 = arith.constant 0 : index
    %41 = vector.load %arg8[%c0_19, %c0_20, %c0_21] : memref<1x8x32xbf16, #tpu.memory_space<vmem>>, vector<1x8x32xbf16>
    %42 = vector.shape_cast %41 : vector<1x8x32xbf16> to vector<8x32xbf16>
    %43 = vector.shape_cast %40 : vector<8x32xbf16> to vector<1x8x32xbf16>
    tpu.vector_store %arg8[%c0_19, %c0_20, %c0_21], %43 {strides = array<i32>} : memref<1x8x32xbf16, #tpu.memory_space<vmem>>, vector<1x8x32xbf16>,
    %44 = vector.extract_strided_slice %31 {offsets = [0, 64], sizes = [8, 32], strides = [1, 1]} : vector<8x96xf32> to vector<8x32xf32>
    %45 = arith.truncf %44 : vector<8x32xf32> to vector<8x32xbf16>
    %c0_22 = arith.constant 0 : index
    %c0_23 = arith.constant 0 : index
    %c0_24 = arith.constant 0 : index
    %46 = vector.load %arg9[%c0_22, %c0_23, %c0_24] : memref<1x8x32xbf16, #tpu.memory_space<vmem>>, vector<1x8x32xbf16>
    %47 = vector.shape_cast %46 : vector<1x8x32xbf16> to vector<8x32xbf16>
    %48 = vector.shape_cast %45 : vector<8x32xbf16> to vector<1x8x32xbf16>
    tpu.vector_store %arg9[%c0_22, %c0_23, %c0_24], %48 {strides = array<i32>} : memref<1x8x32xbf16, #tpu.memory_space<vmem>>, vector<1x8x32xbf16>,
    return
  }
  func.func @transform_0(%arg0: i32, %arg1: i32) -> (i32, i32, i32) {
    %c0_i32 = arith.constant 0 : i32
    %c0_i32_0 = arith.constant 0 : i32
    return %arg0, %arg1, %c0_i32 : i32, i32, i32
  }
  func.func @transform_1(%arg0: i32, %arg1: i32) -> (i32, i32) {
    %c0_i32 = arith.constant 0 : i32
    %c0_i32_0 = arith.constant 0 : i32
    %c0_i32_1 = arith.constant 0 : i32
    return %c0_i32, %c0_i32_0 : i32, i32
  }
  func.func @transform_2(%arg0: i32, %arg1: i32) -> (i32, i32) {
    %c0_i32 = arith.constant 0 : i32
    %c0_i32_0 = arith.constant 0 : i32
    %c0_i32_1 = arith.constant 0 : i32
    return %c0_i32, %c0_i32_0 : i32, i32
  }
  func.func @transform_3(%arg0: i32, %arg1: i32) -> (i32, i32) {
    %c0_i32 = arith.constant 0 : i32
    %c0_i32_0 = arith.constant 0 : i32
    %c0_i32_1 = arith.constant 0 : i32
    return %c0_i32, %c0_i32_0 : i32, i32
  }
  func.func @transform_4(%arg0: i32, %arg1: i32) -> (i32, i32) {
    %c0_i32 = arith.constant 0 : i32
    %c0_i32_0 = arith.constant 0 : i32
    %c0_i32_1 = arith.constant 0 : i32
    return %c0_i32, %c0_i32_0 : i32, i32
  }
  func.func @transform_5(%arg0: i32, %arg1: i32) -> (i32, i32, i32) {
    %c0_i32 = arith.constant 0 : i32
    %c0_i32_0 = arith.constant 0 : i32
    return %arg0, %arg1, %c0_i32 : i32, i32, i32
  }
  func.func @transform_6(%arg0: i32, %arg1: i32) -> (i32, i32, i32) {
    %c0_i32 = arith.constant 0 : i32
    %c0_i32_0 = arith.constant 0 : i32
    return %arg0, %arg1, %c0_i32 : i32, i32, i32
  }
  func.func @transform_7(%arg0: i32, %arg1: i32) -> (i32, i32, i32) {
    %c0_i32 = arith.constant 0 : i32
    %c0_i32_0 = arith.constant 0 : i32
    return %arg0, %arg1, %c0_i32 : i32, i32, i32
  }
}

</mosaic_0001>

<llo_original>
// kernel: tpu_custom_call.1
$region0: #{tpu_custom_call.1}
  #allocation0 [shape = 'u32[]', space=smem, size = 0x4, offset = 0x4, fixed_abs, tag = 'smem constant byte address 0x4 - core index']
  #allocation1 [shape = 'u32[144,128]{1,0:T(1,128)}', space=vmem, size = 0x12000, scoped, tag = 'internal scratch']
  %s0 = inlined_call_operand.hbm [shape: f32[2,8,32], index: 0, kind: input, shape index: {}]
  %s1 = inlined_call_operand.hbm [shape: f32[1,32], index: 1, kind: input, shape index: {}]
  %s2 = inlined_call_operand.hbm [shape: f32[1,32], index: 2, kind: input, shape index: {}]
  %s3 = inlined_call_operand.hbm [shape: bf16[32,96], index: 3, kind: input, shape index: {}]
  %s4 = inlined_call_operand.hbm [shape: f32[1,96], index: 4, kind: input, shape index: {}]
  %s5 = inlined_call_operand.hbm [shape: bf16[2,8,32], index: 5, kind: output, shape index: {0}]
  %s6 = inlined_call_operand.hbm [shape: bf16[2,8,32], index: 6, kind: output, shape index: {1}]
  %s7 = inlined_call_operand.hbm [shape: bf16[2,8,32], index: 7, kind: output, shape index: {2}]
  %8 = xla_tuple %s5, %s6, %s7
  %s9 = sld [smem:[#allocation0]]
  $region89: #{tpu_custom_call.1} parent=0
    _
  %s11 = ssub.s32 1, %s9
  %s12 = scalar_select 0, %s11, %s9
  $region1: #{tpu_custom_call.1} parent=0
    #allocation2 [shape = 'u8[8192]{0}', space=vmem, size = 0x2000, scoped, tag = 'input window, operand 0']
    #allocation3 [shape = 's32[2]{0}', space=sflag, size = 0x8, scoped, tag = 'scoped memory for tpu_custom_call.1']
    #allocation4 [shape = 's32[2]{0}', space=sflag, size = 0x8, scoped, tag = 'scoped memory for tpu_custom_call.1']
    #allocation5 [shape = 'u8[512]{0}', space=vmem, size = 0x400, scoped, tag = 'input window, operand 1, single buffered']
    #allocation6 [shape = 's32[1]{0}', space=sflag, size = 0x4, scoped, tag = 'scoped memory for tpu_custom_call.1']
    #allocation7 [shape = 'u8[512]{0}', space=vmem, size = 0x400, scoped, tag = 'input window, operand 2, single buffered']
    #allocation8 [shape = 'u8[8192]{0}', space=vmem, size = 0x2000, scoped, tag = 'input window, operand 3, single buffered']
    #allocation9 [shape = 's32[1]{0}', space=sflag, size = 0x4, scoped, tag = 'scoped memory for tpu_custom_call.1']
    #allocation10 [shape = 'u8[512]{0}', space=vmem, size = 0x400, scoped, tag = 'input window, operand 4, single buffered']
    #allocation11 [shape = 'u8[4096]{0}', space=vmem, size = 0x1000, scoped, tag = 'output window, operand 0']
    #allocation12 [shape = 'u8[4096]{0}', space=vmem, size = 0x1000, scoped, tag = 'output window, operand 1']
    #allocation13 [shape = 's32[2]{0}', space=sflag, size = 0x8, scoped, tag = 'scoped memory for tpu_custom_call.1']
    #allocation14 [shape = 'u8[4096]{0}', space=vmem, size = 0x1000, scoped, tag = 'output window, operand 2']
    %13 = vsyncpa [#allocation3], 0
    %s14 = scalar_lea.sflag [#allocation3], 1
    %15 = vsyncpa %s14, 0
    %16 = vsyncpa [#allocation6], 0
    %17 = vsyncpa [#allocation9], 0
    %18 = vsyncpa [#allocation4], 0
    %s19 = scalar_lea.sflag [#allocation4], 1
    %20 = vsyncpa %s19, 0
    %21 = vsyncpa [#allocation13], 0
    %s22 = scalar_lea.sflag [#allocation13], 1
    %23 = vsyncpa %s22, 0
    loop: start=0, step=1, limit=4
    $region2: #{tpu_custom_call.1} parent=1 // loop_pre_header
      _
    $region3: #{tpu_custom_call.1} parent=1 // loop_header
      %s25 = sphi 0, %s29
      %p26 = scmp.ge.s32.totalorder %s25, 4
      %s32 = sphi 0, %s44
      %s33 = sphi 0, %s40
      %s34 = sphi 0, %s32
      %s35 = sphi 0, %s33
      %s36 = sphi 0, %s34
      %s37 = sphi 0, %s35
      %s49 = sphi 0, %s51
      %s52 = sphi 0, %s49
      %s53 = sphi 0, %s52
      %s69 = sphi 0, %s53
      %s73 = sphi 0, %s73
      %s75 = sphi 0, %s73
      %s76 = sphi 0, %s75
      %s90 = sphi 0, %s76
      %s94 = sphi 0, %s94
      %s96 = sphi 0, %s94
      %s97 = sphi 0, %s96
      %s111 = sphi 0, %s97
      %s115 = sphi 0, %s115
      %s117 = sphi 0, %s115
      %s118 = sphi 0, %s117
      %s132 = sphi 0, %s118
      %s136 = sphi 0, %s136
      %s138 = sphi 0, %s136
      %s139 = sphi 0, %s138
      %s153 = sphi 0, %s139
      %s161 = sphi 0, %s163
      %s164 = sphi 0, %s161
      %s165 = sphi 0, %s164
      %s181 = sphi 0, %s165
      %s189 = sphi 0, %s191
      %s192 = sphi 0, %s189
      %s193 = sphi 0, %s192
      %s209 = sphi 0, %s193
      %s217 = sphi 0, %s219
      %s220 = sphi 0, %s217
      %s221 = sphi 0, %s220
      %s237 = sphi 0, %s221
    $region4: #{tpu_custom_call.1} parent=1 // loop_header_branch
      %28 = sbr.rel (%p26) target = $region8
    $region5: #{tpu_custom_call.1} parent=1 // loop_body
      %s30 = ssub.s32 %s25, 1
      %s31 = ssub.s32 %s25, 2
      %s38 = sadd.s32 1, %s33
      %p39 = scmp.ge.s32.totalorder %s38, 1
      %s40 = scalar_select %p39, 0, %s38
      %s41 = sadd.s32 1, %s32
      %s42 = scalar_select %p39, %s41, %s32
      %p43 = scmp.ge.s32.totalorder %s42, 2
      %s44 = scalar_select %p43, 0, %s42
      %s45 = ssub.s32 %s32, %s44
      %s46 = ssub.s32 %s33, %s40
      %s47 = sor.u32 %s45, %s46
      %p48 = scmp.eq.s32.totalorder %s47, 0
      %s50 = sadd.s32 %s49, 1
      %s51 = scalar_select %p48, %s49, %s50
      %p54 = pneg %p48
      %p55 = scmp.eq.s32.totalorder %s25, 1
      %p56 = por %p54, %p55
      %p57 = scmp.ne.s32.totalorder %s49, %s52
      %p58 = scmp.eq.s32.totalorder %s25, 0
      %p59 = por %p57, %p58
      %p60 = scmp.ne.s32.totalorder %s49, %s52
      %p61 = scmp.eq.s32.totalorder %s30, 1
      %p62 = por %p60, %p61
      %p63 = scmp.ne.s32.totalorder %s52, %s53
      %p64 = scmp.eq.s32.totalorder %s30, 0
      %p65 = por %p63, %p64
      %p66 = scmp.ne.s32.totalorder %s52, %s53
      %p67 = scmp.eq.s32.totalorder %s31, 1
      %p68 = por %p66, %p67
      %p70 = scmp.ne.s32.totalorder %s53, %s69
      %p71 = scmp.eq.s32.totalorder %s31, 0
      %p72 = por %p70, %p71
      %s74 = sadd.s32 %s73, 1
      %p77 = scmp.eq.s32.totalorder %s25, 1
      %p78 = scmp.ne.s32.totalorder %s73, %s75
      %p79 = scmp.eq.s32.totalorder %s25, 0
      %p80 = por %p78, %p79
      %p81 = scmp.ne.s32.totalorder %s73, %s75
      %p82 = scmp.eq.s32.totalorder %s30, 1
      %p83 = por %p81, %p82
      %p84 = scmp.ne.s32.totalorder %s75, %s76
      %p85 = scmp.eq.s32.totalorder %s30, 0
      %p86 = por %p84, %p85
      %p87 = scmp.ne.s32.totalorder %s75, %s76
      %p88 = scmp.eq.s32.totalorder %s31, 1
      %p89 = por %p87, %p88
      %p91 = scmp.ne.s32.totalorder %s76, %s90
      %p92 = scmp.eq.s32.totalorder %s31, 0
      %p93 = por %p91, %p92
      %s95 = sadd.s32 %s94, 1
      %p98 = scmp.eq.s32.totalorder %s25, 1
      %p99 = scmp.ne.s32.totalorder %s94, %s96
      %p100 = scmp.eq.s32.totalorder %s25, 0
      %p101 = por %p99, %p100
      %p102 = scmp.ne.s32.totalorder %s94, %s96
      %p103 = scmp.eq.s32.totalorder %s30, 1
      %p104 = por %p102, %p103
      %p105 = scmp.ne.s32.totalorder %s96, %s97
      %p106 = scmp.eq.s32.totalorder %s30, 0
      %p107 = por %p105, %p106
      %p108 = scmp.ne.s32.totalorder %s96, %s97
      %p109 = scmp.eq.s32.totalorder %s31, 1
      %p110 = por %p108, %p109
      %p112 = scmp.ne.s32.totalorder %s97, %s111
      %p113 = scmp.eq.s32.totalorder %s31, 0
      %p114 = por %p112, %p113
      %s116 = sadd.s32 %s115, 1
      %p119 = scmp.eq.s32.totalorder %s25, 1
      %p120 = scmp.ne.s32.totalorder %s115, %s117
      %p121 = scmp.eq.s32.totalorder %s25, 0
      %p122 = por %p120, %p121
      %p123 = scmp.ne.s32.totalorder %s115, %s117
      %p124 = scmp.eq.s32.totalorder %s30, 1
      %p125 = por %p123, %p124
      %p126 = scmp.ne.s32.totalorder %s117, %s118
      %p127 = scmp.eq.s32.totalorder %s30, 0
      %p128 = por %p126, %p127
      %p129 = scmp.ne.s32.totalorder %s117, %s118
      %p130 = scmp.eq.s32.totalorder %s31, 1
      %p131 = por %p129, %p130
      %p133 = scmp.ne.s32.totalorder %s118, %s132
      %p134 = scmp.eq.s32.totalorder %s31, 0
      %p135 = por %p133, %p134
      %s137 = sadd.s32 %s136, 1
      %p140 = scmp.eq.s32.totalorder %s25, 1
      %p141 = scmp.ne.s32.totalorder %s136, %s138
      %p142 = scmp.eq.s32.totalorder %s25, 0
      %p143 = por %p141, %p142
      %p144 = scmp.ne.s32.totalorder %s136, %s138
      %p145 = scmp.eq.s32.totalorder %s30, 1
      %p146 = por %p144, %p145
      %p147 = scmp.ne.s32.totalorder %s138, %s139
      %p148 = scmp.eq.s32.totalorder %s30, 0
      %p149 = por %p147, %p148
      %p150 = scmp.ne.s32.totalorder %s138, %s139
      %p151 = scmp.eq.s32.totalorder %s31, 1
      %p152 = por %p150, %p151
      %p154 = scmp.ne.s32.totalorder %s139, %s153
      %p155 = scmp.eq.s32.totalorder %s31, 0
      %p156 = por %p154, %p155
      %s157 = ssub.s32 %s32, %s44
      %s158 = ssub.s32 %s33, %s40
      %s159 = sor.u32 %s157, %s158
      %p160 = scmp.eq.s32.totalorder %s159, 0
      %s162 = sadd.s32 %s161, 1
      %s163 = scalar_select %p160, %s161, %s162
      %p166 = pneg %p160
      %p167 = scmp.eq.s32.totalorder %s25, 1
      %p168 = por %p166, %p167
      %p169 = scmp.ne.s32.totalorder %s161, %s164
      %p170 = scmp.eq.s32.totalorder %s25, 0
      %p171 = por %p169, %p170
      %p172 = scmp.ne.s32.totalorder %s161, %s164
      %p173 = scmp.eq.s32.totalorder %s30, 1
      %p174 = por %p172, %p173
      %p175 = scmp.ne.s32.totalorder %s164, %s165
      %p176 = scmp.eq.s32.totalorder %s30, 0
      %p177 = por %p175, %p176
      %p178 = scmp.ne.s32.totalorder %s164, %s165
      %p179 = scmp.eq.s32.totalorder %s31, 1
      %p180 = por %p178, %p179
      %p182 = scmp.ne.s32.totalorder %s165, %s181
      %p183 = scmp.eq.s32.totalorder %s31, 0
      %p184 = por %p182, %p183
      %s185 = ssub.s32 %s32, %s44
      %s186 = ssub.s32 %s33, %s40
      %s187 = sor.u32 %s185, %s186
      %p188 = scmp.eq.s32.totalorder %s187, 0
      %s190 = sadd.s32 %s189, 1
      %s191 = scalar_select %p188, %s189, %s190
      %p194 = pneg %p188
      %p195 = scmp.eq.s32.totalorder %s25, 1
      %p196 = por %p194, %p195
      %p197 = scmp.ne.s32.totalorder %s189, %s192
      %p198 = scmp.eq.s32.totalorder %s25, 0
      %p199 = por %p197, %p198
      %p200 = scmp.ne.s32.totalorder %s189, %s192
      %p201 = scmp.eq.s32.totalorder %s30, 1
      %p202 = por %p200, %p201
      %p203 = scmp.ne.s32.totalorder %s192, %s193
      %p204 = scmp.eq.s32.totalorder %s30, 0
      %p205 = por %p203, %p204
      %p206 = scmp.ne.s32.totalorder %s192, %s193
      %p207 = scmp.eq.s32.totalorder %s31, 1
      %p208 = por %p206, %p207
      %p210 = scmp.ne.s32.totalorder %s193, %s209
      %p211 = scmp.eq.s32.totalorder %s31, 0
      %p212 = por %p210, %p211
      %s213 = ssub.s32 %s32, %s44
      %s214 = ssub.s32 %s33, %s40
      %s215 = sor.u32 %s213, %s214
      %p216 = scmp.eq.s32.totalorder %s215, 0
      %s218 = sadd.s32 %s217, 1
      %s219 = scalar_select %p216, %s217, %s218
      %p222 = pneg %p216
      %p223 = scmp.eq.s32.totalorder %s25, 1
      %p224 = por %p222, %p223
      %p225 = scmp.ne.s32.totalorder %s217, %s220
      %p226 = scmp.eq.s32.totalorder %s25, 0
      %p227 = por %p225, %p226
      %p228 = scmp.ne.s32.totalorder %s217, %s220
      %p229 = scmp.eq.s32.totalorder %s30, 1
      %p230 = por %p228, %p229
      %p231 = scmp.ne.s32.totalorder %s220, %s221
      %p232 = scmp.eq.s32.totalorder %s30, 0
      %p233 = por %p231, %p232
      %p234 = scmp.ne.s32.totalorder %s220, %s221
      %p235 = scmp.eq.s32.totalorder %s31, 1
      %p236 = por %p234, %p235
      %p238 = scmp.ne.s32.totalorder %s221, %s237
      %p239 = scmp.eq.s32.totalorder %s31, 0
      %p240 = por %p238, %p239
      %p241 = scmp.le.s32.totalorder 1, %s25
      %p242 = scmp.lt.s32.totalorder %s25, 3
      %p243 = pnand %p241, %p242
      %p244 = pneg %p243
      // Predicated region
      $region9: #{tpu_custom_call.1} parent=5 // pred_check
        _
      $region10: #{tpu_custom_call.1} parent=5 // pred_check_branch
        %246 = sbr.rel (%p243) target = $region12
      $region11: #{tpu_custom_call.1} parent=5 // pred_region
        %s247 = ssub.s32 %s25, 1
        // Predicated region
        $region13: #{tpu_custom_call.1} parent=11 // pred_check
          %p248 = pneg %p86
        $region14: #{tpu_custom_call.1} parent=11 // pred_check_branch
          %250 = sbr.rel (%p248) target = $region16
        $region15: #{tpu_custom_call.1} parent=11 // pred_region
          %s252 = ssub.s32 16, 16
          %253 = vsyncadd [#allocation6], %s252
          %s255 = sshll.u32 [#allocation5], 4
          %s256 = int_to_ptr.vmem [resolvable:$true] %s255
          %258 = dma.hbm_to_vmem [thread:$0]  %s1, 16, %s256, [#allocation6]
        $region16: #{tpu_custom_call.1} parent=11 // pred_fallthru
          _
        // Predicated region
        $region17: #{tpu_custom_call.1} parent=11 // pred_check
          %p259 = pneg %p107
        $region18: #{tpu_custom_call.1} parent=11 // pred_check_branch
          %261 = sbr.rel (%p259) target = $region20
        $region19: #{tpu_custom_call.1} parent=11 // pred_region
          %s263 = ssub.s32 16, 16
          %264 = vsyncadd [#allocation6], %s263
          %s266 = sshll.u32 [#allocation7], 4
          %s267 = int_to_ptr.vmem [resolvable:$true] %s266
          %269 = dma.hbm_to_vmem [thread:$0]  %s2, 16, %s267, [#allocation6]
        $region20: #{tpu_custom_call.1} parent=11 // pred_fallthru
          _
        // Predicated region
        $region21: #{tpu_custom_call.1} parent=11 // pred_check
          %p270 = pneg %p128
        $region22: #{tpu_custom_call.1} parent=11 // pred_check_branch
          %272 = sbr.rel (%p270) target = $region24
        $region23: #{tpu_custom_call.1} parent=11 // pred_region
          %s274 = ssub.s32 256, 256
          %275 = vsyncadd [#allocation9], %s274
          %s276 = sshll.u32 [#allocation8], 4
          %s277 = int_to_ptr.vmem [resolvable:$true] %s276
          %282 = dma.hbm_to_vmem [thread:$0]  %s3, 256, %s277, [#allocation9], 64, 64, 4
        $region24: #{tpu_custom_call.1} parent=11 // pred_fallthru
          _
        // Predicated region
        $region25: #{tpu_custom_call.1} parent=11 // pred_check
          %p283 = pneg %p149
        $region26: #{tpu_custom_call.1} parent=11 // pred_check_branch
          %285 = sbr.rel (%p283) target = $region28
        $region27: #{tpu_custom_call.1} parent=11 // pred_region
          %s287 = ssub.s32 16, 16
          %288 = vsyncadd [#allocation9], %s287
          %s290 = sshll.u32 [#allocation10], 4
          %s291 = int_to_ptr.vmem [resolvable:$true] %s290
          %293 = dma.hbm_to_vmem [thread:$0]  %s4, 16, %s291, [#allocation9]
        $region28: #{tpu_custom_call.1} parent=11 // pred_fallthru
          _
      $region12: #{tpu_custom_call.1} parent=5 // pred_fallthru
        _
      %p294 = scmp.lt.s32.totalorder %s25, 2
      // Predicated region
      $region29: #{tpu_custom_call.1} parent=5 // pred_check
        %p295 = pneg %p294
      $region30: #{tpu_custom_call.1} parent=5 // pred_check_branch
        %297 = sbr.rel (%p295) target = $region32
      $region31: #{tpu_custom_call.1} parent=5 // pred_region
        // Predicated region
        $region33: #{tpu_custom_call.1} parent=31 // pred_check
          %p298 = pneg %p59
        $region34: #{tpu_custom_call.1} parent=31 // pred_check_branch
          %300 = sbr.rel (%p298) target = $region36
        $region35: #{tpu_custom_call.1} parent=31 // pred_region
          %s301 = sand.u32 %s49, 1
          %s302 = scalar_lea.sflag [#allocation3], %s301
          %s303 = sand.u32 %s49, 1
          %s304 = smul.addr %s303, 8
          %s305 = scalar_lea.vmem [#allocation2], %s304
          %s307 = ssub.s32 128, 128
          %308 = vsyncadd %s302, %s307
          %s309 = sadd.s32 %s33, %s32
          %s310 = smul.addr %s309, 128
          %s311 = scalar_lea.hbm %s0, %s310
          %s313 = sshll.u32 %s305, 4
          %s314 = int_to_ptr.vmem [resolvable:$true] %s313
          %316 = dma.hbm_to_vmem [thread:$0]  %s311, 128, %s314, %s302
        $region36: #{tpu_custom_call.1} parent=31 // pred_fallthru
          _
      $region32: #{tpu_custom_call.1} parent=5 // pred_fallthru
        _
      %p317 = scmp.le.s32.totalorder 1, %s25
      %p318 = scmp.lt.s32.totalorder %s25, 3
      %p319 = pnand %p317, %p318
      %p320 = pneg %p319
      // Predicated region
      $region37: #{tpu_custom_call.1} parent=5 // pred_check
        _
      $region38: #{tpu_custom_call.1} parent=5 // pred_check_branch
        %322 = sbr.rel (%p319) target = $region40
      $region39: #{tpu_custom_call.1} parent=5 // pred_region
        %s323 = ssub.s32 %s25, 1
        %s324 = sand.u32 %s52, 1
        %s325 = scalar_lea.sflag [#allocation3], %s324
        %s326 = sand.u32 %s52, 1
        %s327 = smul.addr %s326, 8
        %s328 = scalar_lea.vmem [#allocation2], %s327
        // Predicated region
        $region41: #{tpu_custom_call.1} parent=39 // pred_check
          %p329 = pneg %p65
        $region42: #{tpu_custom_call.1} parent=39 // pred_check_branch
          %331 = sbr.rel (%p329) target = $region44
        $region43: #{tpu_custom_call.1} parent=39 // pred_region
          %332 = dma.done %s325, 128
        $region44: #{tpu_custom_call.1} parent=39 // pred_fallthru
          _
        // Predicated region
        $region45: #{tpu_custom_call.1} parent=39 // pred_check
          %p333 = pneg %p86
        $region46: #{tpu_custom_call.1} parent=39 // pred_check_branch
          %335 = sbr.rel (%p333) target = $region48
        $region47: #{tpu_custom_call.1} parent=39 // pred_region
          %336 = dma.done [#allocation6], 16
        $region48: #{tpu_custom_call.1} parent=39 // pred_fallthru
          _
        // Predicated region
        $region49: #{tpu_custom_call.1} parent=39 // pred_check
          %p337 = pneg %p107
        $region50: #{tpu_custom_call.1} parent=39 // pred_check_branch
          %339 = sbr.rel (%p337) target = $region52
        $region51: #{tpu_custom_call.1} parent=39 // pred_region
          %340 = dma.done [#allocation6], 16
        $region52: #{tpu_custom_call.1} parent=39 // pred_fallthru
          _
        // Predicated region
        $region53: #{tpu_custom_call.1} parent=39 // pred_check
          %p341 = pneg %p128
        $region54: #{tpu_custom_call.1} parent=39 // pred_check_branch
          %343 = sbr.rel (%p341) target = $region56
        $region55: #{tpu_custom_call.1} parent=39 // pred_region
          %344 = dma.done [#allocation9], 256
        $region56: #{tpu_custom_call.1} parent=39 // pred_fallthru
          _
        // Predicated region
        $region57: #{tpu_custom_call.1} parent=39 // pred_check
          %p345 = pneg %p149
        $region58: #{tpu_custom_call.1} parent=39 // pred_check_branch
          %347 = sbr.rel (%p345) target = $region60
        $region59: #{tpu_custom_call.1} parent=39 // pred_region
          %348 = dma.done [#allocation9], 16
        $region60: #{tpu_custom_call.1} parent=39 // pred_fallthru
          _
        %s349 = sand.u32 %s52, 1
        %s350 = scalar_lea.sflag [#allocation3], %s349
        %s351 = sand.u32 %s52, 1
        %s352 = smul.addr %s351, 8
        %s353 = scalar_lea.vmem [#allocation2], %s352
        %p354 = pneg %p65
        %p355 = pneg %p62
        %p356 = pneg %p86
        %p357 = pneg %p83
        %p358 = pneg %p107
        %p359 = pneg %p104
        %p360 = pneg %p128
        %p361 = pneg %p125
        %p362 = pneg %p149
        %p363 = pneg %p146
        %p364 = pneg %p177
        %p365 = pneg %p174
        %s366 = sand.u32 %s164, 1
        %s367 = scalar_lea.sflag [#allocation4], %s366
        %s368 = sand.u32 %s164, 1
        %s369 = smul.addr %s368, 4
        %s370 = scalar_lea.vmem [#allocation11], %s369
        %p371 = pneg %p205
        %p372 = pneg %p202
        %s373 = sand.u32 %s30, 1
        %s374 = scalar_lea.sflag [#allocation13], %s373
        %s375 = sand.u32 %s192, 1
        %s376 = smul.addr %s375, 4
        %s377 = scalar_lea.vmem [#allocation12], %s376
        %p378 = pneg %p233
        %p379 = pneg %p230
        %s380 = sand.u32 %s30, 1
        %s381 = scalar_lea.sflag [#allocation13], %s380
        %s382 = sand.u32 %s220, 1
        %s383 = smul.addr %s382, 4
        %s384 = scalar_lea.vmem [#allocation14], %s383
        %v386 = vld [vmem:[%s328] sm:$0xff]
        %v387 = vld [vmem:[#allocation5] sm:$0x1]
        %v388 = vld [vmem:[#allocation7] sm:$0x1]
        %vm389 = vcmask 261120
        %v390 = vsel %vm389, %v386, 0.0
        %391 = vadd.xlane.f32.xlu0 %v390
        %v392 = vpop.xlane.xlu0 %391
        %v393 = vrcp.pop 32.0
        %v394 = vmul.f32 %v392, %v393
        %v395 = vsub.f32 %v386, %v394
        %v396 = vmul.f32 %v395, %v395
        %v397 = vsel %vm389, %v396, 0.0
        %398 = vadd.xlane.f32.xlu0 %v397
        %v399 = vpop.xlane.xlu0 %398
        %v400 = vmul.f32 %v399, %v393
        %v401 = vadd.f32 %v400, 1e-05
        %v402 = vrsqrt.pop %v401
        %v403 = vmul.f32 %v395, %v402
        %v405 = vlaneseq
        %v406 = vshrl.u32 %v405, 7
        %v407 = vsub.s32 0, %v406
        %v408 = vrot.slane %v387, %v407
        %v410 = vmul.f32 %v403, %v408
        %v412 = vlaneseq
        %v413 = vshrl.u32 %v412, 7
        %v414 = vsub.s32 0, %v413
        %v415 = vrot.slane %v388, %v414
        %v417 = vadd.f32 %v410, %v415
        %v418 = vpack.c.bf16 %v417, %v417
        %v419 = vld [vmem:[#allocation8] sm:$0xf]
        %v420 = vld [vmem:[#allocation8 + $0x4] sm:$0xf]
        %v421 = vld [vmem:[#allocation8 + $0x8] sm:$0xf]
        %v422 = vld [vmem:[#allocation8 + $0xc] sm:$0xf]
        %v423 = vld [vmem:[#allocation10] sm:$0x1]
        %v425 = vlaneseq
        %v426 = vshrl.u32 %v425, 7
        %v427 = vsub.s32 0, %v426
        %v428 = vrot.slane %v423, %v427
        %v434 = vunpack.c.l.b16 %v419
        %v435 = vunpack.c.l.b16 %v420
        %v436 = vunpack.c.l.b16 %v421
        %v437 = vunpack.c.l.b16 %v422
        %v438 = vpack.c.b16 %v435, %v434
        %v439 = vpack.c.b16 %v437, %v436
        %v443 = vsel %vm389, %v418, 0
        %445 = vmatprep.subr.bf16.mxu0 0
        %446 = vmatpush1.bf16.msra.mxu0 %v438
        %447 = vmatprep.subr.bf16.mxu0 0
        %448 = vmatpush1.bf16.msra.mxu0 %v439
        %449 = vmatprep.subr.bf16.mxu0 0
        %450 = vmatpush1.bf16.msra.mxu0 0
        %451 = vmatprep.subr.bf16.mxu0 0
        %452 = vmatpush1.bf16.msra.mxu0 0
        %453 = vmatprep.subr.bf16.mxu0 0
        %454 = vmatpush1.bf16.msra.mxu0 0
        %455 = vmatprep.subr.bf16.mxu0 0
        %456 = vmatpush1.bf16.msra.mxu0 0
        %457 = vmatprep.subr.bf16.mxu0 0
        %458 = vmatpush1.bf16.msra.mxu0 0
        %459 = vmatprep.subr.bf16.mxu0 0
        %460 = vmatpush1.bf16.msra.mxu0 0
        %461 = vmatprep.subr.bf16.mxu0 0
        %462 = vmatpush1.bf16.msra.mxu0 0
        %463 = vmatprep.subr.bf16.mxu0 0
        %464 = vmatpush1.bf16.msra.mxu0 0
        %465 = vmatprep.subr.bf16.mxu0 0
        %466 = vmatpush1.bf16.msra.mxu0 0
        %467 = vmatprep.subr.bf16.mxu0 0
        %468 = vmatpush1.bf16.msra.mxu0 0
        %469 = vmatprep.subr.bf16.mxu0 0
        %470 = vmatpush1.bf16.msra.mxu0 0
        %471 = vmatprep.subr.bf16.mxu0 0
        %472 = vmatpush1.bf16.msra.mxu0 0
        %473 = vmatprep.subr.bf16.mxu0 0
        %474 = vmatpush1.bf16.msra.mxu0 0
        %475 = vmatprep.subr.bf16.mxu0 0
        %476 = vmatpush1.bf16.msra.mxu0 0
        %477 = vmatprep.mubr.bf16.mxu0 0
        %478 = vmatmul.mubr.bf16.gmra.mrb[0].mxu0 %v443
        %v479 = vpop.f32.mrb[0].mxu0
        %v480 = vadd.f32 %v428, %v479
        %v481 = vpop.f32.mrb[0].mxu0
        %v482 = vpop.f32.mrb[0].mxu0
        %v483 = vpop.f32.mrb[0].mxu0
        %484 = vdwg.mxu0
        %v485 = vmul.f32 %v480, 0.35355338
        %v486 = vpack.c.bf16 %v485, %v485
        %vm487 = vcmask 257024
        %488 = vst.msk [vmem:[%s370] sm:$0xf] %vm487, %v486
        %v489 = vpack.c.bf16 %v480, %v480
        %v491 = vunpack.c.l.b16 %v489
        %v492 = vpack.c.b16 %v491, %v491
        %493 = vrot.lane.b32.xlu0 %v492, 96
        %v494 = vpop.permute.xlu0 %493
        %496 = vst.msk [vmem:[%s377] sm:$0xf] %vm487, %v494
        %497 = vrot.lane.b32.xlu0 %v492, 64
        %v498 = vpop.permute.xlu0 %497
        %500 = vst.msk [vmem:[%s384] sm:$0xf] %vm487, %v498
        %s501 = sand.u32 %s164, 1
        %s502 = scalar_lea.sflag [#allocation4], %s501
        %s503 = sand.u32 %s164, 1
        %s504 = smul.addr %s503, 4
        %s505 = scalar_lea.vmem [#allocation11], %s504
        %s506 = sand.u32 %s30, 1
        %s507 = scalar_lea.sflag [#allocation13], %s506
        %s508 = sand.u32 %s192, 1
        %s509 = smul.addr %s508, 4
        %s510 = scalar_lea.vmem [#allocation12], %s509
        %s511 = sand.u32 %s30, 1
        %s512 = scalar_lea.sflag [#allocation13], %s511
        %s513 = sand.u32 %s220, 1
        %s514 = smul.addr %s513, 4
        %s515 = scalar_lea.vmem [#allocation14], %s514
        // Predicated region
        $region61: #{tpu_custom_call.1} parent=39 // pred_check
          %p516 = pneg %p174
        $region62: #{tpu_custom_call.1} parent=39 // pred_check_branch
          %518 = sbr.rel (%p516) target = $region64
        $region63: #{tpu_custom_call.1} parent=39 // pred_region
          %s520 = ssub.s32 64, 64
          %521 = vsyncadd %s502, %s520
          %s522 = sadd.s32 %s35, %s34
          %s523 = smul.addr %s522, 64
          %s524 = scalar_lea.hbm %s5, %s523
          %s526 = sshll.u32 %s505, 4
          %s527 = int_to_ptr.vmem [resolvable:$true] %s526
          %529 = dma.vmem_to_hbm [thread:$0]  %s527, 64, %s524, %s502
        $region64: #{tpu_custom_call.1} parent=39 // pred_fallthru
          _
        // Predicated region
        $region65: #{tpu_custom_call.1} parent=39 // pred_check
          %p530 = pneg %p202
        $region66: #{tpu_custom_call.1} parent=39 // pred_check_branch
          %532 = sbr.rel (%p530) target = $region68
        $region67: #{tpu_custom_call.1} parent=39 // pred_region
          %s534 = ssub.s32 64, 64
          %535 = vsyncadd %s507, %s534
          %s536 = sadd.s32 %s35, %s34
          %s537 = smul.addr %s536, 64
          %s538 = scalar_lea.hbm %s6, %s537
          %s540 = sshll.u32 %s510, 4
          %s541 = int_to_ptr.vmem [resolvable:$true] %s540
          %543 = dma.vmem_to_hbm [thread:$0]  %s541, 64, %s538, %s507
        $region68: #{tpu_custom_call.1} parent=39 // pred_fallthru
          _
        // Predicated region
        $region69: #{tpu_custom_call.1} parent=39 // pred_check
          %p544 = pneg %p230
        $region70: #{tpu_custom_call.1} parent=39 // pred_check_branch
          %546 = sbr.rel (%p544) target = $region72
        $region71: #{tpu_custom_call.1} parent=39 // pred_region
          %s548 = ssub.s32 64, 64
          %549 = vsyncadd %s512, %s548
          %s550 = sadd.s32 %s35, %s34
          %s551 = smul.addr %s550, 64
          %s552 = scalar_lea.hbm %s7, %s551
          %s554 = sshll.u32 %s515, 4
          %s555 = int_to_ptr.vmem [resolvable:$true] %s554
          %557 = dma.vmem_to_hbm [thread:$0]  %s555, 64, %s552, %s512
        $region72: #{tpu_custom_call.1} parent=39 // pred_fallthru
          _
      $region40: #{tpu_custom_call.1} parent=5 // pred_fallthru
        _
      %p558 = scmp.le.s32.totalorder 2, %s25
      // Predicated region
      $region73: #{tpu_custom_call.1} parent=5 // pred_check
        %p559 = pneg %p558
      $region74: #{tpu_custom_call.1} parent=5 // pred_check_branch
        %561 = sbr.rel (%p559) target = $region76
      $region75: #{tpu_custom_call.1} parent=5 // pred_region
        %s562 = ssub.s32 %s25, 2
        // Predicated region
        $region77: #{tpu_custom_call.1} parent=75 // pred_check
          %p563 = pneg %p180
        $region78: #{tpu_custom_call.1} parent=75 // pred_check_branch
          %565 = sbr.rel (%p563) target = $region80
        $region79: #{tpu_custom_call.1} parent=75 // pred_region
          %s566 = sand.u32 %s165, 1
          %s567 = scalar_lea.sflag [#allocation4], %s566
          %s568 = sand.u32 %s165, 1
          %s569 = smul.addr %s568, 4
          %s570 = scalar_lea.vmem [#allocation11], %s569
          %571 = dma.done %s567, 64
        $region80: #{tpu_custom_call.1} parent=75 // pred_fallthru
          _
        // Predicated region
        $region81: #{tpu_custom_call.1} parent=75 // pred_check
          %p572 = pneg %p208
        $region82: #{tpu_custom_call.1} parent=75 // pred_check_branch
          %574 = sbr.rel (%p572) target = $region84
        $region83: #{tpu_custom_call.1} parent=75 // pred_region
          %s575 = sand.u32 %s31, 1
          %s576 = scalar_lea.sflag [#allocation13], %s575
          %s577 = sand.u32 %s193, 1
          %s578 = smul.addr %s577, 4
          %s579 = scalar_lea.vmem [#allocation12], %s578
          %580 = dma.done %s576, 64
        $region84: #{tpu_custom_call.1} parent=75 // pred_fallthru
          _
        // Predicated region
        $region85: #{tpu_custom_call.1} parent=75 // pred_check
          %p581 = pneg %p236
        $region86: #{tpu_custom_call.1} parent=75 // pred_check_branch
          %583 = sbr.rel (%p581) target = $region88
        $region87: #{tpu_custom_call.1} parent=75 // pred_region
          %s584 = sand.u32 %s31, 1
          %s585 = scalar_lea.sflag [#allocation13], %s584
          %s586 = sand.u32 %s221, 1
          %s587 = smul.addr %s586, 4
          %s588 = scalar_lea.vmem [#allocation14], %s587
          %589 = dma.done %s585, 64
        $region88: #{tpu_custom_call.1} parent=75 // pred_fallthru
          _
      $region76: #{tpu_custom_call.1} parent=5 // pred_fallthru
        _
    $region6: #{tpu_custom_call.1} parent=1 // loop_footer
      %s29 = sadd.s32 1, %s25
    $region7: #{tpu_custom_call.1} parent=1 // loop_footer_branch
      %24 = sbr.rel target = $region3
    $region8: #{tpu_custom_call.1} parent=1 // loop_exit
      _
    %590 = vsyncpa [#allocation3], 1
    %s591 = scalar_lea.sflag [#allocation3], 1
    %592 = vsyncpa %s591, 1
    %593 = vsyncpa [#allocation6], 1
    %594 = vsyncpa [#allocation9], 1
    %595 = vsyncpa [#allocation4], 1
    %s596 = scalar_lea.sflag [#allocation4], 1
    %597 = vsyncpa %s596, 1
    %598 = vsyncpa [#allocation13], 1
    %s599 = scalar_lea.sflag [#allocation13], 1
    %600 = vsyncpa %s599, 1

</llo_original>
